<compile_context>
chip_gen: v5e
topology: v5e:2x2
jax: 0.10.0
libtpu: 0.0.40
codegen_flags: <defaults>
</compile_context>

<pallas_src>
import jax
import jax.numpy as jnp
from jax import lax
from jax.experimental import pallas as pl
from jax.experimental.pallas import tpu as pltpu


def _round_up(x, m):
    return ((x + m - 1) // m) * m


def _pad2(x, rows, cols):
    return jnp.pad(x, ((0, rows - x.shape[0]), (0, cols - x.shape[1])))


def rnn_fc_kernel(emb_ref, wih_ref, bias_ref, whh_ref, wfc_ref, bfc_ref,
                  out_ref, xw_ref):
    """Elman RNN (tanh) recurrence over time + final linear layer.

    emb_ref : [T, Bp, Ep]  time-major embedded input (padded)
    wih_ref : [Ep, Hp]     input->hidden weight (transposed vs. PyTorch, padded)
    bias_ref: [1, Hp]      pre-summed b_ih + b_hh (padded)
    whh_ref : [Hp, Hp]     hidden->hidden weight (transposed, padded)
    wfc_ref : [Hp, Op]     fc weight (transposed, padded)
    bfc_ref : [1, Op]
    out_ref : [Bp, Op]     predictions (padded, lane-dense)
    xw_ref  : VMEM [T, Bp, Hp] scratch for the hoisted input projection
    """
    T, Bp, Ep = emb_ref.shape
    Hp = whh_ref.shape[0]

    # (1) Hoisted input projection: ONE [T*Bp, Ep] x [Ep, Hp] matmul,
    #     biases fused once (pre-summed in the wrapper).
    x_all = emb_ref[...].reshape(T * Bp, Ep)
    xw_ref[...] = (jnp.dot(x_all, wih_ref[...],
                           preferred_element_type=jnp.float32)
                   + bias_ref[...]).reshape(T, Bp, Hp)

    # (2) Recurrence: per step only h @ W_hh + xw[t] -> tanh.
    #     h lives in the fori_loop carry (vregs); W_hh loaded once.
    w_hh = whh_ref[...]

    def step(t, h):
        pre = xw_ref[t] + jnp.dot(h, w_hh, preferred_element_type=jnp.float32)
        return jnp.tanh(pre)

    h_last = lax.fori_loop(0, T, step, jnp.zeros((Bp, Hp), jnp.float32),
                           unroll=True)

    # (3) Final FC into a lane-dense output slab.
    out_ref[...] = (jnp.dot(h_last, wfc_ref[...],
                            preferred_element_type=jnp.float32)
                    + bfc_ref[...])


def init_params(key, vocab_size, embedding_dim, hidden_dim, output_dim):
    ks = jax.random.split(key, 7)
    scale = 0.1
    embedding = scale * jax.random.normal(ks[0], (vocab_size, embedding_dim),
                                          jnp.float32)
    # padding_idx = 0  ->  zero row (matches nn.Embedding(padding_idx=0))
    embedding = embedding.at[0].set(0.0)
    params = {
        "embedding": embedding,
        "w_ih": scale * jax.random.normal(ks[1], (embedding_dim, hidden_dim),
                                          jnp.float32),
        "b_ih": scale * jax.random.normal(ks[2], (1, hidden_dim), jnp.float32),
        "w_hh": scale * jax.random.normal(ks[3], (hidden_dim, hidden_dim),
                                          jnp.float32),
        "b_hh": scale * jax.random.normal(ks[4], (1, hidden_dim), jnp.float32),
        "w_fc": scale * jax.random.normal(ks[5], (hidden_dim, output_dim),
                                          jnp.float32),
        "b_fc": scale * jax.random.normal(ks[6], (1, output_dim), jnp.float32),
    }
    return params


def rnn_model_forward(text, params):
    """text: int32 [B, T] token ids  ->  predictions float32 [B, O]."""
    B, T = text.shape
    E = params["w_ih"].shape[0]
    H = params["w_hh"].shape[0]
    O = params["w_fc"].shape[1]

    # Hardware-tile padded sizes (sublane=8, lane/MXU=128).
    Bp = _round_up(max(B, 8), 8)
    Ep = _round_up(E, 128)
    Hp = _round_up(H, 128)
    Op = _round_up(O, 128)

    # Zero-pad the embedding table columns and gather TIME-MAJOR directly
    # (padded batch rows use token id 0 -> zero embedding row; sliced off later).
    emb_tab = jnp.pad(params["embedding"], ((0, 0), (0, Ep - E)))   # [V, Ep]
    text_p = jnp.pad(text, ((0, Bp - B), (0, 0)))                   # [Bp, T]
    emb_tm = emb_tab[text_p.T]                                      # [T, Bp, Ep]

    # Padded / pre-transposed weights; biases pre-summed once.
    w_ih = _pad2(params["w_ih"], Ep, Hp)
    w_hh = _pad2(params["w_hh"], Hp, Hp)
    bias = _pad2(params["b_ih"] + params["b_hh"], 1, Hp)            # [1, Hp]
    w_fc = _pad2(params["w_fc"], Hp, Op)
    b_fc = _pad2(params["b_fc"], 1, Op)                             # [1, Op]

    out_p = pl.pallas_call(
        rnn_fc_kernel,
        out_shape=jax.ShapeDtypeStruct((Bp, Op), jnp.float32),
        in_specs=[pl.BlockSpec(memory_space=pltpu.MemorySpace.VMEM)] * 6,
        out_specs=pl.BlockSpec(memory_space=pltpu.MemorySpace.VMEM),
        scratch_shapes=[pltpu.VMEM((T, Bp, Hp), jnp.float32)],
    )(emb_tm, w_ih, bias, w_hh, w_fc, b_fc)

    return out_p[:B, :O]


def reference_forward(text, params):
    """Pure-JAX reference mirroring PyTorch RNNModel.forward semantics."""
    emb = params["embedding"][text]                     # [B, T, E]
    B, T, _ = emb.shape
    H = params["w_hh"].shape[0]
    h = jnp.zeros((B, H), jnp.float32)
    for t in range(T):
        h = jnp.tanh(emb[:, t, :] @ params["w_ih"] + params["b_ih"]
                     + h @ params["w_hh"] + params["b_hh"])
    return h @ params["w_fc"] + params["b_fc"]


if __name__ == "__main__":
    vocab_size, embedding_dim, hidden_dim, output_dim = 50, 16, 32, 4
    batch, seq_len = 2, 8

    key = jax.random.PRNGKey(0)
    k_param, k_text = jax.random.split(key)
    params = init_params(k_param, vocab_size, embedding_dim, hidden_dim,
                         output_dim)
    text = jax.random.randint(k_text, (batch, seq_len), 0, vocab_size,
                              dtype=jnp.int32)

    preds = rnn_model_forward(text, params)
    preds = jax.block_until_ready(preds)

    ref = reference_forward(text, params)
    assert preds.shape == (batch, output_dim)
    assert jnp.allclose(preds, ref, atol=1e-5, rtol=1e-5), (
        f"mismatch: {preds} vs {ref}")

    print("KERNEL_OK")
</pallas_src>

<mosaic_0001>
module attributes {stable_mosaic.version = 11 : i64} {
  func.func @rnn_fc_kernel(%arg0: memref<8x8x128xf32, #tpu.memory_space<vmem>>, %arg1: memref<128x128xf32, #tpu.memory_space<vmem>>, %arg2: memref<1x128xf32, #tpu.memory_space<vmem>>, %arg3: memref<128x128xf32, #tpu.memory_space<vmem>>, %arg4: memref<128x128xf32, #tpu.memory_space<vmem>>, %arg5: memref<1x128xf32, #tpu.memory_space<vmem>>, %arg6: memref<8x128xf32, #tpu.memory_space<vmem>>, %arg7: memref<8x8x128xf32, #tpu.memory_space<vmem>>) attributes {dimension_semantics = [], scalar_prefetch = 0 : i64, scratch_operands = 1 : i64, tpu.core_type = #tpu.core_type<tc>} {
    %c0 = arith.constant 0 : index
    %c0_0 = arith.constant 0 : index
    %c0_1 = arith.constant 0 : index
    %0 = vector.load %arg0[%c0, %c0_0, %c0_1] : memref<8x8x128xf32, #tpu.memory_space<vmem>>, vector<8x8x128xf32>
    %1 = vector.shape_cast %0 : vector<8x8x128xf32> to vector<64x128xf32>
    %c0_2 = arith.constant 0 : index
    %c0_3 = arith.constant 0 : index
    %2 = vector.load %arg1[%c0_2, %c0_3] : memref<128x128xf32, #tpu.memory_space<vmem>>, vector<128x128xf32>
    %cst = arith.constant dense<0.000000e+00> : vector<64x128xf32>
    %3 = tpu.matmul %1, %2, %cst {dimension_numbers = #tpu.dot_dimension_numbers<[1], [0], [0], [1], [0, 0, 1, 1], [], []>} : vector<64x128xf32>, vector<128x128xf32>, vector<64x128xf32> -> vector<64x128xf32>
    %c0_4 = arith.constant 0 : index
    %c0_5 = arith.constant 0 : index
    %4 = vector.load %arg2[%c0_4, %c0_5] : memref<1x128xf32, #tpu.memory_space<vmem>>, vector<1x128xf32>
    %5 = vector.broadcast %4 : vector<1x128xf32> to vector<64x128xf32>
    %6 = arith.addf %3, %5 : vector<64x128xf32>
    %7 = vector.shape_cast %6 : vector<64x128xf32> to vector<8x8x128xf32>
    %c0_6 = arith.constant 0 : index
    %c0_7 = arith.constant 0 : index
    %c0_8 = arith.constant 0 : index
    %8 = vector.load %arg7[%c0_6, %c0_7, %c0_8] : memref<8x8x128xf32, #tpu.memory_space<vmem>>, vector<8x8x128xf32>
    tpu.vector_store %arg7[%c0_6, %c0_7, %c0_8], %7 {strides = array<i32>} : memref<8x8x128xf32, #tpu.memory_space<vmem>>, vector<8x8x128xf32>,
    %c0_9 = arith.constant 0 : index
    %c0_10 = arith.constant 0 : index
    %9 = vector.load %arg3[%c0_9, %c0_10] : memref<128x128xf32, #tpu.memory_space<vmem>>, vector<128x128xf32>
    %cst_11 = arith.constant 0.000000e+00 : f32
    %10 = vector.broadcast %cst_11 : f32 to vector<8x128xf32>
    %c0_i32 = arith.constant 0 : i32
    %11 = arith.index_cast %c0_i32 : i32 to index
    %c0_12 = arith.constant 0 : index
    %c0_13 = arith.constant 0 : index
    %12 = vector.load %arg7[%11, %c0_12, %c0_13] : memref<8x8x128xf32, #tpu.memory_space<vmem>>, vector<1x8x128xf32>
    %13 = vector.shape_cast %12 : vector<1x8x128xf32> to vector<8x128xf32>
    %cst_14 = arith.constant dense<0.000000e+00> : vector<8x128xf32>
    %14 = tpu.matmul %10, %9, %cst_14 {dimension_numbers = #tpu.dot_dimension_numbers<[1], [0], [0], [1], [0, 0, 1, 1], [], []>} : vector<8x128xf32>, vector<128x128xf32>, vector<8x128xf32> -> vector<8x128xf32>
    %15 = arith.addf %13, %14 : vector<8x128xf32>
    %16 = math.tanh %15 : vector<8x128xf32>
    %c1_i32 = arith.constant 1 : i32
    %17 = arith.index_cast %c1_i32 : i32 to index
    %c0_15 = arith.constant 0 : index
    %c0_16 = arith.constant 0 : index
    %18 = vector.load %arg7[%17, %c0_15, %c0_16] : memref<8x8x128xf32, #tpu.memory_space<vmem>>, vector<1x8x128xf32>
    %19 = vector.shape_cast %18 : vector<1x8x128xf32> to vector<8x128xf32>
    %cst_17 = arith.constant dense<0.000000e+00> : vector<8x128xf32>
    %20 = tpu.matmul %16, %9, %cst_17 {dimension_numbers = #tpu.dot_dimension_numbers<[1], [0], [0], [1], [0, 0, 1, 1], [], []>} : vector<8x128xf32>, vector<128x128xf32>, vector<8x128xf32> -> vector<8x128xf32>
    %21 = arith.addf %19, %20 : vector<8x128xf32>
    %22 = math.tanh %21 : vector<8x128xf32>
    %c2_i32 = arith.constant 2 : i32
    %23 = arith.index_cast %c2_i32 : i32 to index
    %c0_18 = arith.constant 0 : index
    %c0_19 = arith.constant 0 : index
    %24 = vector.load %arg7[%23, %c0_18, %c0_19] : memref<8x8x128xf32, #tpu.memory_space<vmem>>, vector<1x8x128xf32>
    %25 = vector.shape_cast %24 : vector<1x8x128xf32> to vector<8x128xf32>
    %cst_20 = arith.constant dense<0.000000e+00> : vector<8x128xf32>
    %26 = tpu.matmul %22, %9, %cst_20 {dimension_numbers = #tpu.dot_dimension_numbers<[1], [0], [0], [1], [0, 0, 1, 1], [], []>} : vector<8x128xf32>, vector<128x128xf32>, vector<8x128xf32> -> vector<8x128xf32>
    %27 = arith.addf %25, %26 : vector<8x128xf32>
    %28 = math.tanh %27 : vector<8x128xf32>
    %c3_i32 = arith.constant 3 : i32
    %29 = arith.index_cast %c3_i32 : i32 to index
    %c0_21 = arith.constant 0 : index
    %c0_22 = arith.constant 0 : index
    %30 = vector.load %arg7[%29, %c0_21, %c0_22] : memref<8x8x128xf32, #tpu.memory_space<vmem>>, vector<1x8x128xf32>
    %31 = vector.shape_cast %30 : vector<1x8x128xf32> to vector<8x128xf32>
    %cst_23 = arith.constant dense<0.000000e+00> : vector<8x128xf32>
    %32 = tpu.matmul %28, %9, %cst_23 {dimension_numbers = #tpu.dot_dimension_numbers<[1], [0], [0], [1], [0, 0, 1, 1], [], []>} : vector<8x128xf32>, vector<128x128xf32>, vector<8x128xf32> -> vector<8x128xf32>
    %33 = arith.addf %31, %32 : vector<8x128xf32>
    %34 = math.tanh %33 : vector<8x128xf32>
    %c4_i32 = arith.constant 4 : i32
    %35 = arith.index_cast %c4_i32 : i32 to index
    %c0_24 = arith.constant 0 : index
    %c0_25 = arith.constant 0 : index
    %36 = vector.load %arg7[%35, %c0_24, %c0_25] : memref<8x8x128xf32, #tpu.memory_space<vmem>>, vector<1x8x128xf32>
    %37 = vector.shape_cast %36 : vector<1x8x128xf32> to vector<8x128xf32>
    %cst_26 = arith.constant dense<0.000000e+00> : vector<8x128xf32>
    %38 = tpu.matmul %34, %9, %cst_26 {dimension_numbers = #tpu.dot_dimension_numbers<[1], [0], [0], [1], [0, 0, 1, 1], [], []>} : vector<8x128xf32>, vector<128x128xf32>, vector<8x128xf32> -> vector<8x128xf32>
    %39 = arith.addf %37, %38 : vector<8x128xf32>
    %40 = math.tanh %39 : vector<8x128xf32>
    %c5_i32 = arith.constant 5 : i32
    %41 = arith.index_cast %c5_i32 : i32 to index
    %c0_27 = arith.constant 0 : index
    %c0_28 = arith.constant 0 : index
    %42 = vector.load %arg7[%41, %c0_27, %c0_28] : memref<8x8x128xf32, #tpu.memory_space<vmem>>, vector<1x8x128xf32>
    %43 = vector.shape_cast %42 : vector<1x8x128xf32> to vector<8x128xf32>
    %cst_29 = arith.constant dense<0.000000e+00> : vector<8x128xf32>
    %44 = tpu.matmul %40, %9, %cst_29 {dimension_numbers = #tpu.dot_dimension_numbers<[1], [0], [0], [1], [0, 0, 1, 1], [], []>} : vector<8x128xf32>, vector<128x128xf32>, vector<8x128xf32> -> vector<8x128xf32>
    %45 = arith.addf %43, %44 : vector<8x128xf32>
    %46 = math.tanh %45 : vector<8x128xf32>
    %c6_i32 = arith.constant 6 : i32
    %47 = arith.index_cast %c6_i32 : i32 to index
    %c0_30 = arith.constant 0 : index
    %c0_31 = arith.constant 0 : index
    %48 = vector.load %arg7[%47, %c0_30, %c0_31] : memref<8x8x128xf32, #tpu.memory_space<vmem>>, vector<1x8x128xf32>
    %49 = vector.shape_cast %48 : vector<1x8x128xf32> to vector<8x128xf32>
    %cst_32 = arith.constant dense<0.000000e+00> : vector<8x128xf32>
    %50 = tpu.matmul %46, %9, %cst_32 {dimension_numbers = #tpu.dot_dimension_numbers<[1], [0], [0], [1], [0, 0, 1, 1], [], []>} : vector<8x128xf32>, vector<128x128xf32>, vector<8x128xf32> -> vector<8x128xf32>
    %51 = arith.addf %49, %50 : vector<8x128xf32>
    %52 = math.tanh %51 : vector<8x128xf32>
    %c7_i32 = arith.constant 7 : i32
    %53 = arith.index_cast %c7_i32 : i32 to index
    %c0_33 = arith.constant 0 : index
    %c0_34 = arith.constant 0 : index
    %54 = vector.load %arg7[%53, %c0_33, %c0_34] : memref<8x8x128xf32, #tpu.memory_space<vmem>>, vector<1x8x128xf32>
    %55 = vector.shape_cast %54 : vector<1x8x128xf32> to vector<8x128xf32>
    %cst_35 = arith.constant dense<0.000000e+00> : vector<8x128xf32>
    %56 = tpu.matmul %52, %9, %cst_35 {dimension_numbers = #tpu.dot_dimension_numbers<[1], [0], [0], [1], [0, 0, 1, 1], [], []>} : vector<8x128xf32>, vector<128x128xf32>, vector<8x128xf32> -> vector<8x128xf32>
    %57 = arith.addf %55, %56 : vector<8x128xf32>
    %58 = math.tanh %57 : vector<8x128xf32>
    %c8_i32 = arith.constant 8 : i32
    %c0_36 = arith.constant 0 : index
    %c0_37 = arith.constant 0 : index
    %59 = vector.load %arg4[%c0_36, %c0_37] : memref<128x128xf32, #tpu.memory_space<vmem>>, vector<128x128xf32>
    %cst_38 = arith.constant dense<0.000000e+00> : vector<8x128xf32>
    %60 = tpu.matmul %58, %59, %cst_38 {dimension_numbers = #tpu.dot_dimension_numbers<[1], [0], [0], [1], [0, 0, 1, 1], [], []>} : vector<8x128xf32>, vector<128x128xf32>, vector<8x128xf32> -> vector<8x128xf32>
    %c0_39 = arith.constant 0 : index
    %c0_40 = arith.constant 0 : index
    %61 = vector.load %arg5[%c0_39, %c0_40] : memref<1x128xf32, #tpu.memory_space<vmem>>, vector<1x128xf32>
    %62 = vector.broadcast %61 : vector<1x128xf32> to vector<8x128xf32>
    %63 = arith.addf %60, %62 : vector<8x128xf32>
    %c0_41 = arith.constant 0 : index
    %c0_42 = arith.constant 0 : index
    %64 = vector.load %arg6[%c0_41, %c0_42] : memref<8x128xf32, #tpu.memory_space<vmem>>, vector<8x128xf32>
    tpu.vector_store %arg6[%c0_41, %c0_42], %63 {strides = array<i32>} : memref<8x128xf32, #tpu.memory_space<vmem>>, vector<8x128xf32>,
    return
  }
}

</mosaic_0001>

<llo_original>
// kernel: tpu_custom_call.1
$region0: #{tpu_custom_call.1}
  #allocation0 [shape = 'u32[]', space=smem, size = 0x4, offset = 0x4, fixed_abs, tag = 'smem constant byte address 0x4 - core index']
  #allocation1 [shape = 'u32[72,128]{1,0:T(1,128)}', space=vmem, size = 0x9000, scoped, tag = 'internal scratch']
  #allocation2 [shape = 'f32[8,8,128]{2,1,0:T(8,128)}', space=vmem, size = 0x8000, scoped, tag = 'scratch operand']
  %s0 = inlined_call_operand.hbm [shape: f32[8,8,128], index: 0, kind: input, shape index: {}]
  %s1 = inlined_call_operand.hbm [shape: f32[128,128], index: 1, kind: input, shape index: {}]
  %s2 = inlined_call_operand.vmem [shape: f32[1,128], index: 2, kind: input, shape index: {}]
  %s3 = inlined_call_operand.hbm [shape: f32[128,128], index: 3, kind: input, shape index: {}]
  %s4 = inlined_call_operand.hbm [shape: f32[128,128], index: 4, kind: input, shape index: {}]
  %s5 = inlined_call_operand.vmem [shape: f32[1,128], index: 5, kind: input, shape index: {}]
  %s6 = inlined_call_operand.hbm [shape: f32[8,128], index: 6, kind: output, shape index: {}]
  %s7 = sld [smem:[#allocation0]]
  $region50: #{tpu_custom_call.1} parent=0
    _
  %s9 = ssub.s32 1, %s7
  %s10 = scalar_select 0, %s9, %s7
  $region1: #{tpu_custom_call.1} parent=0
    #allocation3 [shape = 'u8[32768]{0}', space=vmem, size = 0x8000, scoped, tag = 'input window, operand 0, single buffered']
    #allocation4 [shape = 's32[1]{0}', space=sflag, size = 0x4, scoped, tag = 'scoped memory for tpu_custom_call.1']
    #allocation5 [shape = 's32[1]{0}', space=sflag, size = 0x4, scoped, tag = 'scoped memory for tpu_custom_call.1']
    #allocation6 [shape = 'u8[65536]{0}', space=vmem, size = 0x10000, scoped, tag = 'input window, operand 1, single buffered']
    #allocation7 [shape = 's32[1]{0}', space=sflag, size = 0x4, scoped, tag = 'scoped memory for tpu_custom_call.1']
    #allocation8 [shape = 'u8[65536]{0}', space=vmem, size = 0x10000, scoped, tag = 'input window, operand 3, single buffered']
    #allocation9 [shape = 'u8[65536]{0}', space=vmem, size = 0x10000, scoped, tag = 'input window, operand 4, single buffered']
    #allocation10 [shape = 's32[1]{0}', space=sflag, size = 0x4, scoped, tag = 'scoped memory for tpu_custom_call.1']
    #allocation11 [shape = 'u8[4096]{0}', space=vmem, size = 0x1000, scoped, tag = 'output window, operand 0, single buffered']
    %11 = vsyncpa [#allocation4], 0
    %12 = vsyncpa [#allocation7], 0
    %13 = vsyncpa [#allocation10], 0
    %14 = vsyncpa [#allocation5], 0
    // Predicated region
    $region2: #{tpu_custom_call.1} parent=1 // pred_check
      _
    $region3: #{tpu_custom_call.1} parent=1 // pred_check_branch
      %16 = sbr.rel (0) target = $region5
    $region4: #{tpu_custom_call.1} parent=1 // pred_region
      %18 = vsyncadd [#allocation4], 0
      %s19 = sshll.u32 %s0, 4
      %s20 = int_to_ptr.hbm [resolvable:$true] %s19
      %s21 = sshll.u32 [#allocation3], 4
      %s22 = int_to_ptr.vmem [resolvable:$true] %s21
      %27 = dma.hbm_to_vmem [thread:$0]  %s20, 1024, %s22, [#allocation4], 128, 128, 8
    $region5: #{tpu_custom_call.1} parent=1 // pred_fallthru
      _
    // Predicated region
    $region6: #{tpu_custom_call.1} parent=1 // pred_check
      _
    $region7: #{tpu_custom_call.1} parent=1 // pred_check_branch
      %29 = sbr.rel (0) target = $region9
    $region8: #{tpu_custom_call.1} parent=1 // pred_region
      %31 = vsyncadd [#allocation7], 0
      %s32 = sshll.u32 %s1, 4
      %s33 = int_to_ptr.hbm [resolvable:$true] %s32
      %s34 = sshll.u32 [#allocation6], 4
      %s35 = int_to_ptr.vmem [resolvable:$true] %s34
      %40 = dma.hbm_to_vmem [thread:$0]  %s33, 2048, %s35, [#allocation7], 128, 128, 8
    $region9: #{tpu_custom_call.1} parent=1 // pred_fallthru
      _
    // Predicated region
    $region10: #{tpu_custom_call.1} parent=1 // pred_check
      _
    $region11: #{tpu_custom_call.1} parent=1 // pred_check_branch
      %42 = sbr.rel (0) target = $region13
    $region12: #{tpu_custom_call.1} parent=1 // pred_region
      _
    $region13: #{tpu_custom_call.1} parent=1 // pred_fallthru
      _
    // Predicated region
    $region14: #{tpu_custom_call.1} parent=1 // pred_check
      _
    $region15: #{tpu_custom_call.1} parent=1 // pred_check_branch
      %44 = sbr.rel (0) target = $region17
    $region16: #{tpu_custom_call.1} parent=1 // pred_region
      %46 = vsyncadd [#allocation7], 0
      %s47 = sshll.u32 %s3, 4
      %s48 = int_to_ptr.hbm [resolvable:$true] %s47
      %s49 = sshll.u32 [#allocation8], 4
      %s50 = int_to_ptr.vmem [resolvable:$true] %s49
      %55 = dma.hbm_to_vmem [thread:$0]  %s48, 2048, %s50, [#allocation7], 128, 128, 8
    $region17: #{tpu_custom_call.1} parent=1 // pred_fallthru
      _
    // Predicated region
    $region18: #{tpu_custom_call.1} parent=1 // pred_check
      _
    $region19: #{tpu_custom_call.1} parent=1 // pred_check_branch
      %57 = sbr.rel (0) target = $region21
    $region20: #{tpu_custom_call.1} parent=1 // pred_region
      %59 = vsyncadd [#allocation10], 0
      %s60 = sshll.u32 %s4, 4
      %s61 = int_to_ptr.hbm [resolvable:$true] %s60
      %s62 = sshll.u32 [#allocation9], 4
      %s63 = int_to_ptr.vmem [resolvable:$true] %s62
      %68 = dma.hbm_to_vmem [thread:$0]  %s61, 2048, %s63, [#allocation10], 128, 128, 8
    $region21: #{tpu_custom_call.1} parent=1 // pred_fallthru
      _
    // Predicated region
    $region22: #{tpu_custom_call.1} parent=1 // pred_check
      _
    $region23: #{tpu_custom_call.1} parent=1 // pred_check_branch
      %70 = sbr.rel (0) target = $region25
    $region24: #{tpu_custom_call.1} parent=1 // pred_region
      _
    $region25: #{tpu_custom_call.1} parent=1 // pred_fallthru
      _
    // Predicated region
    $region26: #{tpu_custom_call.1} parent=1 // pred_check
      _
    $region27: #{tpu_custom_call.1} parent=1 // pred_check_branch
      %72 = sbr.rel (0) target = $region29
    $region28: #{tpu_custom_call.1} parent=1 // pred_region
      %74 = dma.done [#allocation4], 1024
    $region29: #{tpu_custom_call.1} parent=1 // pred_fallthru
      _
    // Predicated region
    $region30: #{tpu_custom_call.1} parent=1 // pred_check
      _
    $region31: #{tpu_custom_call.1} parent=1 // pred_check_branch
      %76 = sbr.rel (0) target = $region33
    $region32: #{tpu_custom_call.1} parent=1 // pred_region
      %78 = dma.done [#allocation7], 2048
    $region33: #{tpu_custom_call.1} parent=1 // pred_fallthru
      _
    // Predicated region
    $region34: #{tpu_custom_call.1} parent=1 // pred_check
      _
    $region35: #{tpu_custom_call.1} parent=1 // pred_check_branch
      %80 = sbr.rel (0) target = $region37
    $region36: #{tpu_custom_call.1} parent=1 // pred_region
      %82 = dma.done [#allocation7], 2048
    $region37: #{tpu_custom_call.1} parent=1 // pred_fallthru
      _
    // Predicated region
    $region38: #{tpu_custom_call.1} parent=1 // pred_check
      _
    $region39: #{tpu_custom_call.1} parent=1 // pred_check_branch
      %84 = sbr.rel (0) target = $region41
    $region40: #{tpu_custom_call.1} parent=1 // pred_region
      %86 = dma.done [#allocation10], 2048
    $region41: #{tpu_custom_call.1} parent=1 // pred_fallthru
      _
    %v87 = vld [vmem:[#allocation3] sm:$0xff]
    %v88 = vld [vmem:[#allocation3 + $0x8] sm:$0xff]
    %v89 = vld [vmem:[#allocation3 + $0x10] sm:$0xff]
    %v90 = vld [vmem:[#allocation3 + $0x18] sm:$0xff]
    %v91 = vld [vmem:[#allocation3 + $0x20] sm:$0xff]
    %v92 = vld [vmem:[#allocation3 + $0x28] sm:$0xff]
    %v93 = vld [vmem:[#allocation3 + $0x30] sm:$0xff]
    %v94 = vld [vmem:[#allocation3 + $0x38] sm:$0xff]
    %v95 = vld [vmem:[#allocation6] sm:$0xff]
    %v96 = vld [vmem:[#allocation6 + $0x8] sm:$0xff]
    %v97 = vld [vmem:[#allocation6 + $0x10] sm:$0xff]
    %v98 = vld [vmem:[#allocation6 + $0x18] sm:$0xff]
    %v99 = vld [vmem:[#allocation6 + $0x20] sm:$0xff]
    %v100 = vld [vmem:[#allocation6 + $0x28] sm:$0xff]
    %v101 = vld [vmem:[#allocation6 + $0x30] sm:$0xff]
    %v102 = vld [vmem:[#allocation6 + $0x38] sm:$0xff]
    %v103 = vld [vmem:[#allocation6 + $0x40] sm:$0xff]
    %v104 = vld [vmem:[#allocation6 + $0x48] sm:$0xff]
    %v105 = vld [vmem:[#allocation6 + $0x50] sm:$0xff]
    %v106 = vld [vmem:[#allocation6 + $0x58] sm:$0xff]
    %v107 = vld [vmem:[#allocation6 + $0x60] sm:$0xff]
    %v108 = vld [vmem:[#allocation6 + $0x68] sm:$0xff]
    %v109 = vld [vmem:[#allocation6 + $0x70] sm:$0xff]
    %v110 = vld [vmem:[#allocation6 + $0x78] sm:$0xff]
    %v111 = vld [vmem:[%s2] sm:$0x1]
    %v113 = vperm.slane %v111, 0
    %115 = vmatpush.msra.mxu0 %v110
    %116 = vmatpush.msra.mxu0 %v109
    %117 = vmatpush.msra.mxu0 %v108
    %118 = vmatpush.msra.mxu0 %v107
    %119 = vmatpush.msra.mxu0 %v106
    %120 = vmatpush.msra.mxu0 %v105
    %121 = vmatpush.msra.mxu0 %v104
    %122 = vmatpush.msra.mxu0 %v103
    %123 = vmatpush.msra.mxu0 %v102
    %124 = vmatpush.msra.mxu0 %v101
    %125 = vmatpush.msra.mxu0 %v100
    %126 = vmatpush.msra.mxu0 %v99
    %127 = vmatpush.msra.mxu0 %v98
    %128 = vmatpush.msra.mxu0 %v97
    %129 = vmatpush.msra.mxu0 %v96
    %130 = vmatpush.msra.mxu0 %v95
    %131 = vmatmul.f32.gmra.mxu0 %v87
    %v132 = vpop.f32.mrf.mxu0
    %v133 = vadd.f32 %v113, %v132
    %134 = vmatmul.f32.gmra.mxu0 %v88
    %v135 = vpop.f32.mrf.mxu0
    %v136 = vadd.f32 %v113, %v135
    %137 = vmatmul.f32.gmra.mxu0 %v89
    %v138 = vpop.f32.mrf.mxu0
    %v139 = vadd.f32 %v113, %v138
    %140 = vmatmul.f32.gmra.mxu0 %v90
    %v141 = vpop.f32.mrf.mxu0
    %v142 = vadd.f32 %v113, %v141
    %143 = vmatmul.f32.gmra.mxu0 %v91
    %v144 = vpop.f32.mrf.mxu0
    %v145 = vadd.f32 %v113, %v144
    %146 = vmatmul.f32.gmra.mxu0 %v92
    %v147 = vpop.f32.mrf.mxu0
    %v148 = vadd.f32 %v113, %v147
    %149 = vmatmul.f32.gmra.mxu0 %v93
    %v150 = vpop.f32.mrf.mxu0
    %v151 = vadd.f32 %v113, %v150
    %152 = vmatmul.f32.gmra.mxu0 %v94
    %v153 = vpop.f32.mrf.mxu0
    %v154 = vadd.f32 %v113, %v153
    %155 = vdwg.mxu0
    %156 = vst [vmem:[#allocation2] sm:$0xff] %v133
    %157 = vst [vmem:[#allocation2 + $0x8] sm:$0xff] %v136
    %158 = vst [vmem:[#allocation2 + $0x10] sm:$0xff] %v139
    %159 = vst [vmem:[#allocation2 + $0x18] sm:$0xff] %v142
    %160 = vst [vmem:[#allocation2 + $0x20] sm:$0xff] %v145
    %161 = vst [vmem:[#allocation2 + $0x28] sm:$0xff] %v148
    %162 = vst [vmem:[#allocation2 + $0x30] sm:$0xff] %v151
    %163 = vst [vmem:[#allocation2 + $0x38] sm:$0xff] %v154
    %v164 = vld [vmem:[#allocation8] sm:$0xff]
    %v165 = vld [vmem:[#allocation8 + $0x8] sm:$0xff]
    %v166 = vld [vmem:[#allocation8 + $0x10] sm:$0xff]
    %v167 = vld [vmem:[#allocation8 + $0x18] sm:$0xff]
    %v168 = vld [vmem:[#allocation8 + $0x20] sm:$0xff]
    %v169 = vld [vmem:[#allocation8 + $0x28] sm:$0xff]
    %v170 = vld [vmem:[#allocation8 + $0x30] sm:$0xff]
    %v171 = vld [vmem:[#allocation8 + $0x38] sm:$0xff]
    %v172 = vld [vmem:[#allocation8 + $0x40] sm:$0xff]
    %v173 = vld [vmem:[#allocation8 + $0x48] sm:$0xff]
    %v174 = vld [vmem:[#allocation8 + $0x50] sm:$0xff]
    %v175 = vld [vmem:[#allocation8 + $0x58] sm:$0xff]
    %v176 = vld [vmem:[#allocation8 + $0x60] sm:$0xff]
    %v177 = vld [vmem:[#allocation8 + $0x68] sm:$0xff]
    %v178 = vld [vmem:[#allocation8 + $0x70] sm:$0xff]
    %v179 = vld [vmem:[#allocation8 + $0x78] sm:$0xff]
    %v180 = vld [vmem:[#allocation2] sm:$0xff]
    %181 = vmatpush.msra.mxu0 %v179
    %182 = vmatpush.msra.mxu0 %v178
    %183 = vmatpush.msra.mxu0 %v177
    %184 = vmatpush.msra.mxu0 %v176
    %185 = vmatpush.msra.mxu0 %v175
    %186 = vmatpush.msra.mxu0 %v174
    %187 = vmatpush.msra.mxu0 %v173
    %188 = vmatpush.msra.mxu0 %v172
    %189 = vmatpush.msra.mxu0 %v171
    %190 = vmatpush.msra.mxu0 %v170
    %191 = vmatpush.msra.mxu0 %v169
    %192 = vmatpush.msra.mxu0 %v168
    %193 = vmatpush.msra.mxu0 %v167
    %194 = vmatpush.msra.mxu0 %v166
    %195 = vmatpush.msra.mxu0 %v165
    %196 = vmatpush.msra.mxu0 %v164
    %197 = vmatmul.f32.gmra.mxu0 0.0
    %v198 = vpop.f32.mrf.mxu0
    %v199 = vadd.f32 0.0, %v198
    %200 = vdwg.mxu0
    %v201 = vadd.f32 %v180, %v199
    %v202 = vtanh.pop %v201
    %s203 = scalar_lea.vmem [#allocation2], 8
    %v204 = vld [vmem:[%s203] sm:$0xff]
    %205 = vmatpush.msra.mxu0 %v179
    %206 = vmatpush.msra.mxu0 %v178
    %207 = vmatpush.msra.mxu0 %v177
    %208 = vmatpush.msra.mxu0 %v176
    %209 = vmatpush.msra.mxu0 %v175
    %210 = vmatpush.msra.mxu0 %v174
    %211 = vmatpush.msra.mxu0 %v173
    %212 = vmatpush.msra.mxu0 %v172
    %213 = vmatpush.msra.mxu0 %v171
    %214 = vmatpush.msra.mxu0 %v170
    %215 = vmatpush.msra.mxu0 %v169
    %216 = vmatpush.msra.mxu0 %v168
    %217 = vmatpush.msra.mxu0 %v167
    %218 = vmatpush.msra.mxu0 %v166
    %219 = vmatpush.msra.mxu0 %v165
    %220 = vmatpush.msra.mxu0 %v164
    %221 = vmatmul.f32.gmra.mxu0 %v202
    %v222 = vpop.f32.mrf.mxu0
    %v223 = vadd.f32 0.0, %v222
    %224 = vdwg.mxu0
    %v225 = vadd.f32 %v204, %v223
    %v226 = vtanh.pop %v225
    %s227 = scalar_lea.vmem [#allocation2], 16
    %v228 = vld [vmem:[%s227] sm:$0xff]
    %229 = vmatpush.msra.mxu0 %v179
    %230 = vmatpush.msra.mxu0 %v178
    %231 = vmatpush.msra.mxu0 %v177
    %232 = vmatpush.msra.mxu0 %v176
    %233 = vmatpush.msra.mxu0 %v175
    %234 = vmatpush.msra.mxu0 %v174
    %235 = vmatpush.msra.mxu0 %v173
    %236 = vmatpush.msra.mxu0 %v172
    %237 = vmatpush.msra.mxu0 %v171
    %238 = vmatpush.msra.mxu0 %v170
    %239 = vmatpush.msra.mxu0 %v169
    %240 = vmatpush.msra.mxu0 %v168
    %241 = vmatpush.msra.mxu0 %v167
    %242 = vmatpush.msra.mxu0 %v166
    %243 = vmatpush.msra.mxu0 %v165
    %244 = vmatpush.msra.mxu0 %v164
    %245 = vmatmul.f32.gmra.mxu0 %v226
    %v246 = vpop.f32.mrf.mxu0
    %v247 = vadd.f32 0.0, %v246
    %248 = vdwg.mxu0
    %v249 = vadd.f32 %v228, %v247
    %v250 = vtanh.pop %v249
    %s251 = scalar_lea.vmem [#allocation2], 24
    %v252 = vld [vmem:[%s251] sm:$0xff]
    %253 = vmatpush.msra.mxu0 %v179
    %254 = vmatpush.msra.mxu0 %v178
    %255 = vmatpush.msra.mxu0 %v177
    %256 = vmatpush.msra.mxu0 %v176
    %257 = vmatpush.msra.mxu0 %v175
    %258 = vmatpush.msra.mxu0 %v174
    %259 = vmatpush.msra.mxu0 %v173
    %260 = vmatpush.msra.mxu0 %v172
    %261 = vmatpush.msra.mxu0 %v171
    %262 = vmatpush.msra.mxu0 %v170
    %263 = vmatpush.msra.mxu0 %v169
    %264 = vmatpush.msra.mxu0 %v168
    %265 = vmatpush.msra.mxu0 %v167
    %266 = vmatpush.msra.mxu0 %v166
    %267 = vmatpush.msra.mxu0 %v165
    %268 = vmatpush.msra.mxu0 %v164
    %269 = vmatmul.f32.gmra.mxu0 %v250
    %v270 = vpop.f32.mrf.mxu0
    %v271 = vadd.f32 0.0, %v270
    %272 = vdwg.mxu0
    %v273 = vadd.f32 %v252, %v271
    %v274 = vtanh.pop %v273
    %s275 = scalar_lea.vmem [#allocation2], 32
    %v276 = vld [vmem:[%s275] sm:$0xff]
    %277 = vmatpush.msra.mxu0 %v179
    %278 = vmatpush.msra.mxu0 %v178
    %279 = vmatpush.msra.mxu0 %v177
    %280 = vmatpush.msra.mxu0 %v176
    %281 = vmatpush.msra.mxu0 %v175
    %282 = vmatpush.msra.mxu0 %v174
    %283 = vmatpush.msra.mxu0 %v173
    %284 = vmatpush.msra.mxu0 %v172
    %285 = vmatpush.msra.mxu0 %v171
    %286 = vmatpush.msra.mxu0 %v170
    %287 = vmatpush.msra.mxu0 %v169
    %288 = vmatpush.msra.mxu0 %v168
    %289 = vmatpush.msra.mxu0 %v167
    %290 = vmatpush.msra.mxu0 %v166
    %291 = vmatpush.msra.mxu0 %v165
    %292 = vmatpush.msra.mxu0 %v164
    %293 = vmatmul.f32.gmra.mxu0 %v274
    %v294 = vpop.f32.mrf.mxu0
    %v295 = vadd.f32 0.0, %v294
    %296 = vdwg.mxu0
    %v297 = vadd.f32 %v276, %v295
    %v298 = vtanh.pop %v297
    %s299 = scalar_lea.vmem [#allocation2], 40
    %v300 = vld [vmem:[%s299] sm:$0xff]
    %301 = vmatpush.msra.mxu0 %v179
    %302 = vmatpush.msra.mxu0 %v178
    %303 = vmatpush.msra.mxu0 %v177
    %304 = vmatpush.msra.mxu0 %v176
    %305 = vmatpush.msra.mxu0 %v175
    %306 = vmatpush.msra.mxu0 %v174
    %307 = vmatpush.msra.mxu0 %v173
    %308 = vmatpush.msra.mxu0 %v172
    %309 = vmatpush.msra.mxu0 %v171
    %310 = vmatpush.msra.mxu0 %v170
    %311 = vmatpush.msra.mxu0 %v169
    %312 = vmatpush.msra.mxu0 %v168
    %313 = vmatpush.msra.mxu0 %v167
    %314 = vmatpush.msra.mxu0 %v166
    %315 = vmatpush.msra.mxu0 %v165
    %316 = vmatpush.msra.mxu0 %v164
    %317 = vmatmul.f32.gmra.mxu0 %v298
    %v318 = vpop.f32.mrf.mxu0
    %v319 = vadd.f32 0.0, %v318
    %320 = vdwg.mxu0
    %v321 = vadd.f32 %v300, %v319
    %v322 = vtanh.pop %v321
    %s323 = scalar_lea.vmem [#allocation2], 48
    %v324 = vld [vmem:[%s323] sm:$0xff]
    %325 = vmatpush.msra.mxu0 %v179
    %326 = vmatpush.msra.mxu0 %v178
    %327 = vmatpush.msra.mxu0 %v177
    %328 = vmatpush.msra.mxu0 %v176
    %329 = vmatpush.msra.mxu0 %v175
    %330 = vmatpush.msra.mxu0 %v174
    %331 = vmatpush.msra.mxu0 %v173
    %332 = vmatpush.msra.mxu0 %v172
    %333 = vmatpush.msra.mxu0 %v171
    %334 = vmatpush.msra.mxu0 %v170
    %335 = vmatpush.msra.mxu0 %v169
    %336 = vmatpush.msra.mxu0 %v168
    %337 = vmatpush.msra.mxu0 %v167
    %338 = vmatpush.msra.mxu0 %v166
    %339 = vmatpush.msra.mxu0 %v165
    %340 = vmatpush.msra.mxu0 %v164
    %341 = vmatmul.f32.gmra.mxu0 %v322
    %v342 = vpop.f32.mrf.mxu0
    %v343 = vadd.f32 0.0, %v342
    %344 = vdwg.mxu0
    %v345 = vadd.f32 %v324, %v343
    %v346 = vtanh.pop %v345
    %s347 = scalar_lea.vmem [#allocation2], 56
    %v348 = vld [vmem:[%s347] sm:$0xff]
    %349 = vmatpush.msra.mxu0 %v179
    %350 = vmatpush.msra.mxu0 %v178
    %351 = vmatpush.msra.mxu0 %v177
    %352 = vmatpush.msra.mxu0 %v176
    %353 = vmatpush.msra.mxu0 %v175
    %354 = vmatpush.msra.mxu0 %v174
    %355 = vmatpush.msra.mxu0 %v173
    %356 = vmatpush.msra.mxu0 %v172
    %357 = vmatpush.msra.mxu0 %v171
    %358 = vmatpush.msra.mxu0 %v170
    %359 = vmatpush.msra.mxu0 %v169
    %360 = vmatpush.msra.mxu0 %v168
    %361 = vmatpush.msra.mxu0 %v167
    %362 = vmatpush.msra.mxu0 %v166
    %363 = vmatpush.msra.mxu0 %v165
    %364 = vmatpush.msra.mxu0 %v164
    %365 = vmatmul.f32.gmra.mxu0 %v346
    %v366 = vpop.f32.mrf.mxu0
    %v367 = vadd.f32 0.0, %v366
    %368 = vdwg.mxu0
    %v369 = vadd.f32 %v348, %v367
    %v370 = vtanh.pop %v369
    %v371 = vld [vmem:[#allocation9] sm:$0xff]
    %v372 = vld [vmem:[#allocation9 + $0x8] sm:$0xff]
    %v373 = vld [vmem:[#allocation9 + $0x10] sm:$0xff]
    %v374 = vld [vmem:[#allocation9 + $0x18] sm:$0xff]
    %v375 = vld [vmem:[#allocation9 + $0x20] sm:$0xff]
    %v376 = vld [vmem:[#allocation9 + $0x28] sm:$0xff]
    %v377 = vld [vmem:[#allocation9 + $0x30] sm:$0xff]
    %v378 = vld [vmem:[#allocation9 + $0x38] sm:$0xff]
    %v379 = vld [vmem:[#allocation9 + $0x40] sm:$0xff]
    %v380 = vld [vmem:[#allocation9 + $0x48] sm:$0xff]
    %v381 = vld [vmem:[#allocation9 + $0x50] sm:$0xff]
    %v382 = vld [vmem:[#allocation9 + $0x58] sm:$0xff]
    %v383 = vld [vmem:[#allocation9 + $0x60] sm:$0xff]
    %v384 = vld [vmem:[#allocation9 + $0x68] sm:$0xff]
    %v385 = vld [vmem:[#allocation9 + $0x70] sm:$0xff]
    %v386 = vld [vmem:[#allocation9 + $0x78] sm:$0xff]
    %v387 = vld [vmem:[%s5] sm:$0x1]
    %v389 = vperm.slane %v387, 0
    %391 = vmatpush.msra.mxu0 %v386
    %392 = vmatpush.msra.mxu0 %v385
    %393 = vmatpush.msra.mxu0 %v384
    %394 = vmatpush.msra.mxu0 %v383
    %395 = vmatpush.msra.mxu0 %v382
    %396 = vmatpush.msra.mxu0 %v381
    %397 = vmatpush.msra.mxu0 %v380
    %398 = vmatpush.msra.mxu0 %v379
    %399 = vmatpush.msra.mxu0 %v378
    %400 = vmatpush.msra.mxu0 %v377
    %401 = vmatpush.msra.mxu0 %v376
    %402 = vmatpush.msra.mxu0 %v375
    %403 = vmatpush.msra.mxu0 %v374
    %404 = vmatpush.msra.mxu0 %v373
    %405 = vmatpush.msra.mxu0 %v372
    %406 = vmatpush.msra.mxu0 %v371
    %407 = vmatmul.f32.gmra.mxu0 %v370
    %v408 = vpop.f32.mrf.mxu0
    %v409 = vadd.f32 %v389, %v408
    %410 = vdwg.mxu0
    %411 = vst [vmem:[#allocation11] sm:$0xff] %v409
    // Predicated region
    $region42: #{tpu_custom_call.1} parent=1 // pred_check
      _
    $region43: #{tpu_custom_call.1} parent=1 // pred_check_branch
      %413 = sbr.rel (0) target = $region45
    $region44: #{tpu_custom_call.1} parent=1 // pred_region
      %415 = vsyncadd [#allocation5], 0
      %s417 = sshll.u32 [#allocation11], 4
      %s418 = int_to_ptr.vmem [resolvable:$true] %s417
      %s419 = sshll.u32 %s6, 4
      %s420 = int_to_ptr.hbm [resolvable:$true] %s419
      %422 = dma.vmem_to_hbm [thread:$0]  %s418, 128, %s420, [#allocation5]
    $region45: #{tpu_custom_call.1} parent=1 // pred_fallthru
      _
    // Predicated region
    $region46: #{tpu_custom_call.1} parent=1 // pred_check
      _
    $region47: #{tpu_custom_call.1} parent=1 // pred_check_branch
      %424 = sbr.rel (0) target = $region49
    $region48: #{tpu_custom_call.1} parent=1 // pred_region
      %426 = dma.done [#allocation5], 128
    $region49: #{tpu_custom_call.1} parent=1 // pred_fallthru
      _
    %427 = vsyncpa [#allocation4], 1
    %428 = vsyncpa [#allocation7], 1
    %429 = vsyncpa [#allocation10], 1
    %430 = vsyncpa [#allocation5], 1

</llo_original>
